<compile_context>
chip_gen: v7x
topology: tpu7x:2x2x1
jax: 0.10.0
libtpu: 0.0.40
codegen_flags: <defaults>
</compile_context>

<pallas_src>
import functools
from collections.abc import Sequence

import numpy as np
import jax
import jax.numpy as jnp
from jax.experimental import pallas as pl
from jax.experimental.pallas import tpu as pltpu

_SUBLANE = 8      # f32 sublane tile
_LANE = 128       # lane tile
_BIAS_PAD = 16    # extra rows holding the bias (multiple of 8 and of 16 for bf16 packing)
_MAX_TM = 512     # batch-tile rows (f32) — big enough to hide per-step overhead


def _round_up(n: int, m: int) -> int:
    return ((n + m - 1) // m) * m


# --------------------------------------------------------------------------
# Kernel: whole MLP in one grid step over a batch tile. Intermediate
# activations never leave VMEM/vregs.
# --------------------------------------------------------------------------
def _mlp_kernel(x_ref, w_ref, o_ref, *, n_in0, n_wide, bias_row, n_layers):
    """x_ref: (tm, n_in0)   w_ref: (L, R+16, n_wide)   o_ref: (tm, n_wide).

    h = relu(h @ W_i + b_i) for i < L-1;  o = h @ W_{L-1} + b_{L-1}.
    Weights are stored pre-transposed ([n_in, n_out]) and zero-padded, so the
    MXU gets its canonical (M,K)x(K,N) feed and padded lanes stay exactly 0
    through every ReLU.  Bias add + ReLU ride the VPU in f32.
    """
    h = x_ref[...].astype(jnp.float32)
    for i in range(n_layers):
        rows = n_in0 if i == 0 else n_wide          # static slice of the K rows
        w = w_ref[i, :rows, :]                      # (rows, n_wide), resident in VMEM
        b = w_ref[i, bias_row:bias_row + 1, :].astype(jnp.float32)   # (1, n_wide)
        h = jnp.dot(h.astype(w.dtype), w, preferred_element_type=jnp.float32) + b
        if i < n_layers - 1:
            h = jnp.maximum(h, 0.0)
    o_ref[...] = h.astype(o_ref.dtype)


# --------------------------------------------------------------------------
# One-time, host-side parameter packing (no per-call XLA ops).
# --------------------------------------------------------------------------
def init_params(key, layers: Sequence[int]):
    """PyTorch nn.Linear-style init: U(-1/sqrt(fan_in), +1/sqrt(fan_in)).
    Stored PyTorch-style: W is [n_out, n_in], b is [n_out]."""
    params = []
    for i in range(len(layers) - 1):
        n_in, n_out = layers[i], layers[i + 1]
        key, kw, kb = jax.random.split(key, 3)
        bound = 1.0 / jnp.sqrt(jnp.float32(n_in))
        w = jax.random.uniform(kw, (n_out, n_in), jnp.float32, -bound, bound)
        b = jax.random.uniform(kb, (n_out,), jnp.float32, -bound, bound)
        params.append((w, b))
    return params


def prepare_params(params, param_dtype=jnp.float32):
    """Pack all layers into a single slab (n_layers, R+16, n_wide):
      rows [0:n_in_i]  of slab[i] = W_i^T   (zero-padded to R rows, n_wide cols)
      row  R           of slab[i] = b_i     (zero-padded)
    Done ONCE on the host with numpy -> a single device_put."""
    n_layers = len(params)
    n_in0 = params[0][0].shape[1]
    n_out_last = params[-1][0].shape[0]
    k_pads = [_round_up(w.shape[1], _LANE) for w, _ in params]
    n_pads = [_round_up(w.shape[0], _LANE) for w, _ in params]
    n_wide = max(n_pads)
    r_rows = max(max(k_pads), n_wide)            # weight-row region; >= any h width
    # TODO(synk): on v6e/v7x, pad n_wide to multiples of 256 when scaling widths
    # so each MXU pass fills the full 256-wide systolic array.
    slab = np.zeros((n_layers, r_rows + _BIAS_PAD, n_wide), np.float32)
    for i, (w, b) in enumerate(params):
        n_out, n_in = w.shape
        slab[i, :n_in, :n_out] = np.asarray(w).T
        slab[i, r_rows, :n_out] = np.asarray(b)
    slab = jnp.asarray(slab, dtype=param_dtype)
    cfg = (n_in0, n_out_last, r_rows, n_wide, n_layers)
    return slab, cfg


# --------------------------------------------------------------------------
# Jitted forward: (optional) batch pad -> single pallas_call -> slice.
# --------------------------------------------------------------------------
@functools.partial(jax.jit, static_argnames=("cfg",))
def _fused_mlp(x, slab, *, cfg):
    n_in0, n_out, bias_row, n_wide, n_layers = cfg
    n_batch, n_in = x.shape
    assert n_in == n_in0

    nb8 = _round_up(n_batch, _SUBLANE)
    tm = min(_MAX_TM, nb8)
    nb_p = _round_up(n_batch, tm)
    if nb_p != n_batch:
        # Tiny, fused inside this jit; skipped entirely when batch % tm == 0.
        x = jnp.pad(x, ((0, nb_p - n_batch), (0, 0)))

    kernel = functools.partial(
        _mlp_kernel, n_in0=n_in0, n_wide=n_wide, bias_row=bias_row, n_layers=n_layers
    )

    # VMEM budget: resident weight slab + double-buffered in/out activation
    # tiles + headroom; budgeted for v7x's 64 MiB (keep under ~48 MiB).
    est = (slab.size * slab.dtype.itemsize
           + 2 * tm * n_in0 * 4
           + 2 * tm * n_wide * 4
           + (2 << 20))
    vmem_limit = int(min(max(est, 8 << 20), 48 << 20))

    out_p = pl.pallas_call(
        kernel,
        out_shape=jax.ShapeDtypeStruct((nb_p, n_wide), x.dtype),
        grid=(nb_p // tm,),
        in_specs=[
            pl.BlockSpec((tm, n_in0), lambda i: (i, 0)),        # activation tile streams
            pl.BlockSpec(slab.shape, lambda i: (0, 0, 0)),      # params: block-invariant, resident
        ],
        out_specs=pl.BlockSpec((tm, n_wide), lambda i: (i, 0)),  # lane-dense store
        compiler_params=pltpu.CompilerParams(
            dimension_semantics=("parallel",),                   # shards across v7x's 2 TCs
            vmem_limit_bytes=vmem_limit,
        ),
    )(x, slab)

    return out_p[:n_batch, :n_out]


def make_forward(params, param_dtype=jnp.float32):
    """Prepare (pack/pad/transpose) the parameters ONCE and return a cached
    forward closure: x [n_batch, n_inputs] -> [n_batch, n_outputs]."""
    slab, cfg = prepare_params(params, param_dtype)
    return lambda x: _fused_mlp(x, slab, cfg=cfg)


if __name__ == "__main__":
    layers = [16, 32, 32, 8]
    n_batch = 2

    key = jax.random.PRNGKey(0)
    key, kx = jax.random.split(key)
    x = jax.random.normal(kx, (n_batch, layers[0]), dtype=jnp.float32)
    params = init_params(key, layers)

    # Pure-JAX reference of torch.nn.Linear semantics.
    ref = x
    for (w, b) in params[:-1]:
        ref = jnp.maximum(ref @ w.T + b, 0.0)
    w_last, b_last = params[-1]
    ref = ref @ w_last.T + b_last

    # f32 path (exact, matches reference to 1e-5).
    forward = make_forward(params)
    out = forward(x)
    jax.block_until_ready(out)
    assert out.shape == (n_batch, layers[-1])
    assert jnp.allclose(out, ref, atol=1e-5, rtol=1e-5)

    # bf16 weight-feed path (native MXU dtype on v6e/v7x) — looser tolerance.
    forward_bf16 = make_forward(params, param_dtype=jnp.bfloat16)
    out_bf16 = forward_bf16(x)
    jax.block_until_ready(out_bf16)
    assert jnp.allclose(out_bf16, ref, atol=5e-2, rtol=5e-2)

    print("KERNEL_OK")
</pallas_src>

<mosaic_0001>
module attributes {stable_mosaic.version = 11 : i64} {
  func.func @_mlp_kernel(%arg0: i32, %arg1: memref<8x16xf32, #tpu.memory_space<vmem>>, %arg2: memref<3x144x128xf32, #tpu.memory_space<vmem>>, %arg3: memref<8x128xf32, #tpu.memory_space<vmem>>) attributes {dimension_semantics = [#tpu.dimension_semantics<parallel>], iteration_bounds = array<i64: 1>, scalar_prefetch = 0 : i64, scratch_operands = 0 : i64, tpu.core_type = #tpu.core_type<tc>, window_params = [{transform_indices = @transform_0, window_bounds = array<i64: 8, 16>}, {pipeline_mode = #tpu.pipeline_mode<synchronous>, transform_indices = @transform_1, window_bounds = array<i64: 3, 144, 128>}, {transform_indices = @transform_2, window_bounds = array<i64: 8, 128>}]} {
    %c0 = arith.constant 0 : index
    %c0_0 = arith.constant 0 : index
    %0 = vector.load %arg1[%c0, %c0_0] : memref<8x16xf32, #tpu.memory_space<vmem>>, vector<8x16xf32>
    %c0_1 = arith.constant 0 : index
    %c0_2 = arith.constant 0 : index
    %c0_3 = arith.constant 0 : index
    %1 = vector.load %arg2[%c0_1, %c0_2, %c0_3] : memref<3x144x128xf32, #tpu.memory_space<vmem>>, vector<1x16x128xf32>
    %2 = vector.shape_cast %1 : vector<1x16x128xf32> to vector<16x128xf32>
    %c0_4 = arith.constant 0 : index
    %c128 = arith.constant 128 : index
    %c0_5 = arith.constant 0 : index
    %3 = vector.load %arg2[%c0_4, %c128, %c0_5] : memref<3x144x128xf32, #tpu.memory_space<vmem>>, vector<1x1x128xf32>
    %4 = vector.shape_cast %3 : vector<1x1x128xf32> to vector<1x128xf32>
    %cst = arith.constant dense<0.000000e+00> : vector<8x128xf32>
    %5 = tpu.matmul %0, %2, %cst {dimension_numbers = #tpu.dot_dimension_numbers<[1], [0], [0], [1], [0, 0, 1, 1], [], []>} : vector<8x16xf32>, vector<16x128xf32>, vector<8x128xf32> -> vector<8x128xf32>
    %6 = vector.broadcast %4 : vector<1x128xf32> to vector<8x128xf32>
    %7 = arith.addf %5, %6 : vector<8x128xf32>
    %cst_6 = arith.constant 0.000000e+00 : f32
    %8 = vector.broadcast %cst_6 : f32 to vector<8x128xf32>
    %9 = arith.maximumf %7, %8 : vector<8x128xf32>
    %c1 = arith.constant 1 : index
    %c0_7 = arith.constant 0 : index
    %c0_8 = arith.constant 0 : index
    %10 = vector.load %arg2[%c1, %c0_7, %c0_8] : memref<3x144x128xf32, #tpu.memory_space<vmem>>, vector<1x128x128xf32>
    %11 = vector.shape_cast %10 : vector<1x128x128xf32> to vector<128x128xf32>
    %c1_9 = arith.constant 1 : index
    %c128_10 = arith.constant 128 : index
    %c0_11 = arith.constant 0 : index
    %12 = vector.load %arg2[%c1_9, %c128_10, %c0_11] : memref<3x144x128xf32, #tpu.memory_space<vmem>>, vector<1x1x128xf32>
    %13 = vector.shape_cast %12 : vector<1x1x128xf32> to vector<1x128xf32>
    %cst_12 = arith.constant dense<0.000000e+00> : vector<8x128xf32>
    %14 = tpu.matmul %9, %11, %cst_12 {dimension_numbers = #tpu.dot_dimension_numbers<[1], [0], [0], [1], [0, 0, 1, 1], [], []>} : vector<8x128xf32>, vector<128x128xf32>, vector<8x128xf32> -> vector<8x128xf32>
    %15 = vector.broadcast %13 : vector<1x128xf32> to vector<8x128xf32>
    %16 = arith.addf %14, %15 : vector<8x128xf32>
    %cst_13 = arith.constant 0.000000e+00 : f32
    %17 = vector.broadcast %cst_13 : f32 to vector<8x128xf32>
    %18 = arith.maximumf %16, %17 : vector<8x128xf32>
    %c2 = arith.constant 2 : index
    %c0_14 = arith.constant 0 : index
    %c0_15 = arith.constant 0 : index
    %19 = vector.load %arg2[%c2, %c0_14, %c0_15] : memref<3x144x128xf32, #tpu.memory_space<vmem>>, vector<1x128x128xf32>
    %20 = vector.shape_cast %19 : vector<1x128x128xf32> to vector<128x128xf32>
    %c2_16 = arith.constant 2 : index
    %c128_17 = arith.constant 128 : index
    %c0_18 = arith.constant 0 : index
    %21 = vector.load %arg2[%c2_16, %c128_17, %c0_18] : memref<3x144x128xf32, #tpu.memory_space<vmem>>, vector<1x1x128xf32>
    %22 = vector.shape_cast %21 : vector<1x1x128xf32> to vector<1x128xf32>
    %cst_19 = arith.constant dense<0.000000e+00> : vector<8x128xf32>
    %23 = tpu.matmul %18, %20, %cst_19 {dimension_numbers = #tpu.dot_dimension_numbers<[1], [0], [0], [1], [0, 0, 1, 1], [], []>} : vector<8x128xf32>, vector<128x128xf32>, vector<8x128xf32> -> vector<8x128xf32>
    %24 = vector.broadcast %22 : vector<1x128xf32> to vector<8x128xf32>
    %25 = arith.addf %23, %24 : vector<8x128xf32>
    %c0_20 = arith.constant 0 : index
    %c0_21 = arith.constant 0 : index
    %26 = vector.load %arg3[%c0_20, %c0_21] : memref<8x128xf32, #tpu.memory_space<vmem>>, vector<8x128xf32>
    tpu.vector_store %arg3[%c0_20, %c0_21], %25 {strides = array<i32>} : memref<8x128xf32, #tpu.memory_space<vmem>>, vector<8x128xf32>,
    return
  }
  func.func @transform_0(%arg0: i32) -> (i32, i32) {
    %c0_i32 = arith.constant 0 : i32
    %c0_i32_0 = arith.constant 0 : i32
    return %arg0, %c0_i32 : i32, i32
  }
  func.func @transform_1(%arg0: i32) -> (i32, i32, i32) {
    %c0_i32 = arith.constant 0 : i32
    %c0_i32_0 = arith.constant 0 : i32
    %c0_i32_1 = arith.constant 0 : i32
    %c0_i32_2 = arith.constant 0 : i32
    return %c0_i32, %c0_i32_0, %c0_i32_1 : i32, i32, i32
  }
  func.func @transform_2(%arg0: i32) -> (i32, i32) {
    %c0_i32 = arith.constant 0 : i32
    %c0_i32_0 = arith.constant 0 : i32
    return %arg0, %c0_i32 : i32, i32
  }
}

</mosaic_0001>

<llo_original>
// kernel: _fused_mlp.1
$region0: #{_fused_mlp.1}
  #allocation0 [shape = 'u32[]', space=smem, size = 0x4, offset = 0x4, fixed_abs, tag = 'smem constant byte address 0x4 - core index']
  #allocation1 [shape = 'u32[144,128]{1,0:T(1,128)}', space=vmem, size = 0x12000, scoped, tag = 'internal scratch']
  %s0 = inlined_call_operand.vmem [shape: f32[8,16], index: 0, kind: input, shape index: {}]
  %s1 = inlined_call_operand.hbm [shape: f32[3,144,128], index: 1, kind: input, shape index: {}]
  %s2 = inlined_call_operand.vmem [shape: f32[8,128], index: 2, kind: output, shape index: {}]
  %s3 = sld [smem:[#allocation0]]
  $region22: #{_fused_mlp.1} parent=0
    _
  %s5 = ssub.s32 1, %s3
  %s6 = scalar_select 0, %s5, %s3
  $region1: #{_fused_mlp.1} parent=0
    #allocation2 [shape = 'u8[221184]{0}', space=vmem, size = 0x36000, scoped, tag = 'input window, operand 1, single buffered']
    #allocation3 [shape = 's32[1]{0}', space=sflag, size = 0x4, scoped, tag = 'scoped memory for _fused_mlp.1']
    %7 = vsyncpa [#allocation3], 0
    // Predicated region
    $region2: #{_fused_mlp.1} parent=1 // pred_check
      _
    $region3: #{_fused_mlp.1} parent=1 // pred_check_branch
      %9 = sbr.rel (0) target = $region5
    $region4: #{_fused_mlp.1} parent=1 // pred_region
      _
    $region5: #{_fused_mlp.1} parent=1 // pred_fallthru
      _
    // Predicated region
    $region6: #{_fused_mlp.1} parent=1 // pred_check
      _
    $region7: #{_fused_mlp.1} parent=1 // pred_check_branch
      %11 = sbr.rel (0) target = $region9
    $region8: #{_fused_mlp.1} parent=1 // pred_region
      %s13 = ssub.s32 6912, 6912
      %14 = vsyncadd [#allocation3], %s13
      %s15 = sshll.u32 [#allocation2], 4
      %s16 = int_to_ptr.vmem [resolvable:$true] %s15
      %21 = dma.hbm_to_vmem [thread:$0]  %s1, 6912, %s16, [#allocation3], 128, 128, 8
    $region9: #{_fused_mlp.1} parent=1 // pred_fallthru
      _
    // Predicated region
    $region10: #{_fused_mlp.1} parent=1 // pred_check
      _
    $region11: #{_fused_mlp.1} parent=1 // pred_check_branch
      %23 = sbr.rel (0) target = $region13
    $region12: #{_fused_mlp.1} parent=1 // pred_region
      %24 = dma.done [#allocation3], 6912
    $region13: #{_fused_mlp.1} parent=1 // pred_fallthru
      _
    %v25 = vld [vmem:[%s0] sm:$0xff]
    %v26 = vld [vmem:[#allocation2] sm:$0xff]
    %v27 = vld [vmem:[#allocation2 + $0x8] sm:$0xff]
    %v28 = vld [vmem:[#allocation2 + $0x80] sm:$0x1]
    %v29 = vlaneseq
    %v30 = vshrl.u32 %v29, 7
    %v31 = vsub.s32 0, %v30
    %v32 = vrot.slane %v28, %v31
    %vm33 = vcmask 130048
    %v35 = vsel %vm33, %v25, 0
    %37 = vmatprep.subr.mxu0 0.0
    %38 = vmatpush1.msra.mxu0 %v26
    %39 = vmatprep.subr.mxu0 0.0
    %40 = vmatpush1.msra.mxu0 %v27
    %41 = vmatprep.subr.mxu0 0.0
    %42 = vmatpush1.msra.mxu0 0.0
    %43 = vmatprep.subr.mxu0 0.0
    %44 = vmatpush1.msra.mxu0 0.0
    %45 = vmatprep.subr.mxu0 0.0
    %46 = vmatpush1.msra.mxu0 0.0
    %47 = vmatprep.subr.mxu0 0.0
    %48 = vmatpush1.msra.mxu0 0.0
    %49 = vmatprep.subr.mxu0 0.0
    %50 = vmatpush1.msra.mxu0 0.0
    %51 = vmatprep.subr.mxu0 0.0
    %52 = vmatpush1.msra.mxu0 0.0
    %53 = vmatprep.subr.mxu0 0.0
    %54 = vmatpush1.msra.mxu0 0.0
    %55 = vmatprep.subr.mxu0 0.0
    %56 = vmatpush1.msra.mxu0 0.0
    %57 = vmatprep.subr.mxu0 0.0
    %58 = vmatpush1.msra.mxu0 0.0
    %59 = vmatprep.subr.mxu0 0.0
    %60 = vmatpush1.msra.mxu0 0.0
    %61 = vmatprep.subr.mxu0 0.0
    %62 = vmatpush1.msra.mxu0 0.0
    %63 = vmatprep.subr.mxu0 0.0
    %64 = vmatpush1.msra.mxu0 0.0
    %65 = vmatprep.subr.mxu0 0.0
    %66 = vmatpush1.msra.mxu0 0.0
    %67 = vmatprep.subr.mxu0 0.0
    %68 = vmatpush1.msra.mxu0 0.0
    %69 = vmatprep.subr.mxu0 0.0
    %70 = vmatpush1.msra.mxu0 0.0
    %71 = vmatprep.subr.mxu0 0.0
    %72 = vmatpush1.msra.mxu0 0.0
    %73 = vmatprep.subr.mxu0 0.0
    %74 = vmatpush1.msra.mxu0 0.0
    %75 = vmatprep.subr.mxu0 0.0
    %76 = vmatpush1.msra.mxu0 0.0
    %77 = vmatprep.subr.mxu0 0.0
    %78 = vmatpush1.msra.mxu0 0.0
    %79 = vmatprep.subr.mxu0 0.0
    %80 = vmatpush1.msra.mxu0 0.0
    %81 = vmatprep.subr.mxu0 0.0
    %82 = vmatpush1.msra.mxu0 0.0
    %83 = vmatprep.subr.mxu0 0.0
    %84 = vmatpush1.msra.mxu0 0.0
    %85 = vmatprep.subr.mxu0 0.0
    %86 = vmatpush1.msra.mxu0 0.0
    %87 = vmatprep.subr.mxu0 0.0
    %88 = vmatpush1.msra.mxu0 0.0
    %89 = vmatprep.subr.mxu0 0.0
    %90 = vmatpush1.msra.mxu0 0.0
    %91 = vmatprep.subr.mxu0 0.0
    %92 = vmatpush1.msra.mxu0 0.0
    %93 = vmatprep.subr.mxu0 0.0
    %94 = vmatpush1.msra.mxu0 0.0
    %95 = vmatprep.subr.mxu0 0.0
    %96 = vmatpush1.msra.mxu0 0.0
    %97 = vmatprep.subr.mxu0 0.0
    %98 = vmatpush1.msra.mxu0 0.0
    %99 = vmatprep.subr.mxu0 0.0
    %100 = vmatpush1.msra.mxu0 0.0
    %101 = vmatprep.mubr.f32.mxu0 0.0
    %102 = vmatmul.mubr.f32.gmra.mrb[0].mxu0 %v35
    %v103 = vpop.f32.mrb[0].mxu0
    %v104 = vadd.f32 %v32, %v103
    %v105 = vpop.f32.mrb[0].mxu0
    %106 = vdwg.mxu0
    %v107 = vmax.f32 %v104, 0.0
    %s108 = scalar_lea.vmem [#allocation2], 144
    %v109 = vld [vmem:[%s108] sm:$0xff]
    %v110 = vld [vmem:[%s108 + $0x8] sm:$0xff]
    %v111 = vld [vmem:[%s108 + $0x10] sm:$0xff]
    %v112 = vld [vmem:[%s108 + $0x18] sm:$0xff]
    %v113 = vld [vmem:[%s108 + $0x20] sm:$0xff]
    %v114 = vld [vmem:[%s108 + $0x28] sm:$0xff]
    %v115 = vld [vmem:[%s108 + $0x30] sm:$0xff]
    %v116 = vld [vmem:[%s108 + $0x38] sm:$0xff]
    %v117 = vld [vmem:[%s108 + $0x40] sm:$0xff]
    %v118 = vld [vmem:[%s108 + $0x48] sm:$0xff]
    %v119 = vld [vmem:[%s108 + $0x50] sm:$0xff]
    %v120 = vld [vmem:[%s108 + $0x58] sm:$0xff]
    %v121 = vld [vmem:[%s108 + $0x60] sm:$0xff]
    %v122 = vld [vmem:[%s108 + $0x68] sm:$0xff]
    %v123 = vld [vmem:[%s108 + $0x70] sm:$0xff]
    %v124 = vld [vmem:[%s108 + $0x78] sm:$0xff]
    %v125 = vld [vmem:[%s108 + $0x80] sm:$0x1]
    %v126 = vlaneseq
    %v127 = vshrl.u32 %v126, 7
    %v128 = vsub.s32 0, %v127
    %v129 = vrot.slane %v125, %v128
    %130 = vmatprep.subr.mxu0 0.0
    %131 = vmatpush1.msra.mxu0 %v109
    %132 = vmatprep.subr.mxu0 0.0
    %133 = vmatpush1.msra.mxu0 %v110
    %134 = vmatprep.subr.mxu0 0.0
    %135 = vmatpush1.msra.mxu0 %v111
    %136 = vmatprep.subr.mxu0 0.0
    %137 = vmatpush1.msra.mxu0 %v112
    %138 = vmatprep.subr.mxu0 0.0
    %139 = vmatpush1.msra.mxu0 %v113
    %140 = vmatprep.subr.mxu0 0.0
    %141 = vmatpush1.msra.mxu0 %v114
    %142 = vmatprep.subr.mxu0 0.0
    %143 = vmatpush1.msra.mxu0 %v115
    %144 = vmatprep.subr.mxu0 0.0
    %145 = vmatpush1.msra.mxu0 %v116
    %146 = vmatprep.subr.mxu0 0.0
    %147 = vmatpush1.msra.mxu0 %v117
    %148 = vmatprep.subr.mxu0 0.0
    %149 = vmatpush1.msra.mxu0 %v118
    %150 = vmatprep.subr.mxu0 0.0
    %151 = vmatpush1.msra.mxu0 %v119
    %152 = vmatprep.subr.mxu0 0.0
    %153 = vmatpush1.msra.mxu0 %v120
    %154 = vmatprep.subr.mxu0 0.0
    %155 = vmatpush1.msra.mxu0 %v121
    %156 = vmatprep.subr.mxu0 0.0
    %157 = vmatpush1.msra.mxu0 %v122
    %158 = vmatprep.subr.mxu0 0.0
    %159 = vmatpush1.msra.mxu0 %v123
    %160 = vmatprep.subr.mxu0 0.0
    %161 = vmatpush1.msra.mxu0 %v124
    %162 = vmatprep.subr.mxu0 0.0
    %163 = vmatpush1.msra.mxu0 0.0
    %164 = vmatprep.subr.mxu0 0.0
    %165 = vmatpush1.msra.mxu0 0.0
    %166 = vmatprep.subr.mxu0 0.0
    %167 = vmatpush1.msra.mxu0 0.0
    %168 = vmatprep.subr.mxu0 0.0
    %169 = vmatpush1.msra.mxu0 0.0
    %170 = vmatprep.subr.mxu0 0.0
    %171 = vmatpush1.msra.mxu0 0.0
    %172 = vmatprep.subr.mxu0 0.0
    %173 = vmatpush1.msra.mxu0 0.0
    %174 = vmatprep.subr.mxu0 0.0
    %175 = vmatpush1.msra.mxu0 0.0
    %176 = vmatprep.subr.mxu0 0.0
    %177 = vmatpush1.msra.mxu0 0.0
    %178 = vmatprep.subr.mxu0 0.0
    %179 = vmatpush1.msra.mxu0 0.0
    %180 = vmatprep.subr.mxu0 0.0
    %181 = vmatpush1.msra.mxu0 0.0
    %182 = vmatprep.subr.mxu0 0.0
    %183 = vmatpush1.msra.mxu0 0.0
    %184 = vmatprep.subr.mxu0 0.0
    %185 = vmatpush1.msra.mxu0 0.0
    %186 = vmatprep.subr.mxu0 0.0
    %187 = vmatpush1.msra.mxu0 0.0
    %188 = vmatprep.subr.mxu0 0.0
    %189 = vmatpush1.msra.mxu0 0.0
    %190 = vmatprep.subr.mxu0 0.0
    %191 = vmatpush1.msra.mxu0 0.0
    %192 = vmatprep.subr.mxu0 0.0
    %193 = vmatpush1.msra.mxu0 0.0
    %194 = vmatprep.mubr.f32.mxu0 0.0
    %195 = vmatmul.mubr.f32.gmra.mrb[0].mxu0 %v107
    %v196 = vpop.f32.mrb[0].mxu0
    %v197 = vadd.f32 %v129, %v196
    %v198 = vpop.f32.mrb[0].mxu0
    %199 = vdwg.mxu0
    %v200 = vmax.f32 %v197, 0.0
    %s201 = scalar_lea.vmem [#allocation2], 288
    %v202 = vld [vmem:[%s201] sm:$0xff]
    %v203 = vld [vmem:[%s201 + $0x8] sm:$0xff]
    %v204 = vld [vmem:[%s201 + $0x10] sm:$0xff]
    %v205 = vld [vmem:[%s201 + $0x18] sm:$0xff]
    %v206 = vld [vmem:[%s201 + $0x20] sm:$0xff]
    %v207 = vld [vmem:[%s201 + $0x28] sm:$0xff]
    %v208 = vld [vmem:[%s201 + $0x30] sm:$0xff]
    %v209 = vld [vmem:[%s201 + $0x38] sm:$0xff]
    %v210 = vld [vmem:[%s201 + $0x40] sm:$0xff]
    %v211 = vld [vmem:[%s201 + $0x48] sm:$0xff]
    %v212 = vld [vmem:[%s201 + $0x50] sm:$0xff]
    %v213 = vld [vmem:[%s201 + $0x58] sm:$0xff]
    %v214 = vld [vmem:[%s201 + $0x60] sm:$0xff]
    %v215 = vld [vmem:[%s201 + $0x68] sm:$0xff]
    %v216 = vld [vmem:[%s201 + $0x70] sm:$0xff]
    %v217 = vld [vmem:[%s201 + $0x78] sm:$0xff]
    %v218 = vld [vmem:[%s201 + $0x80] sm:$0x1]
    %v219 = vlaneseq
    %v220 = vshrl.u32 %v219, 7
    %v221 = vsub.s32 0, %v220
    %v222 = vrot.slane %v218, %v221
    %223 = vmatprep.subr.mxu0 0.0
    %224 = vmatpush1.msra.mxu0 %v202
    %225 = vmatprep.subr.mxu0 0.0
    %226 = vmatpush1.msra.mxu0 %v203
    %227 = vmatprep.subr.mxu0 0.0
    %228 = vmatpush1.msra.mxu0 %v204
    %229 = vmatprep.subr.mxu0 0.0
    %230 = vmatpush1.msra.mxu0 %v205
    %231 = vmatprep.subr.mxu0 0.0
    %232 = vmatpush1.msra.mxu0 %v206
    %233 = vmatprep.subr.mxu0 0.0
    %234 = vmatpush1.msra.mxu0 %v207
    %235 = vmatprep.subr.mxu0 0.0
    %236 = vmatpush1.msra.mxu0 %v208
    %237 = vmatprep.subr.mxu0 0.0
    %238 = vmatpush1.msra.mxu0 %v209
    %239 = vmatprep.subr.mxu0 0.0
    %240 = vmatpush1.msra.mxu0 %v210
    %241 = vmatprep.subr.mxu0 0.0
    %242 = vmatpush1.msra.mxu0 %v211
    %243 = vmatprep.subr.mxu0 0.0
    %244 = vmatpush1.msra.mxu0 %v212
    %245 = vmatprep.subr.mxu0 0.0
    %246 = vmatpush1.msra.mxu0 %v213
    %247 = vmatprep.subr.mxu0 0.0
    %248 = vmatpush1.msra.mxu0 %v214
    %249 = vmatprep.subr.mxu0 0.0
    %250 = vmatpush1.msra.mxu0 %v215
    %251 = vmatprep.subr.mxu0 0.0
    %252 = vmatpush1.msra.mxu0 %v216
    %253 = vmatprep.subr.mxu0 0.0
    %254 = vmatpush1.msra.mxu0 %v217
    %255 = vmatprep.subr.mxu0 0.0
    %256 = vmatpush1.msra.mxu0 0.0
    %257 = vmatprep.subr.mxu0 0.0
    %258 = vmatpush1.msra.mxu0 0.0
    %259 = vmatprep.subr.mxu0 0.0
    %260 = vmatpush1.msra.mxu0 0.0
    %261 = vmatprep.subr.mxu0 0.0
    %262 = vmatpush1.msra.mxu0 0.0
    %263 = vmatprep.subr.mxu0 0.0
    %264 = vmatpush1.msra.mxu0 0.0
    %265 = vmatprep.subr.mxu0 0.0
    %266 = vmatpush1.msra.mxu0 0.0
    %267 = vmatprep.subr.mxu0 0.0
    %268 = vmatpush1.msra.mxu0 0.0
    %269 = vmatprep.subr.mxu0 0.0
    %270 = vmatpush1.msra.mxu0 0.0
    %271 = vmatprep.subr.mxu0 0.0
    %272 = vmatpush1.msra.mxu0 0.0
    %273 = vmatprep.subr.mxu0 0.0
    %274 = vmatpush1.msra.mxu0 0.0
    %275 = vmatprep.subr.mxu0 0.0
    %276 = vmatpush1.msra.mxu0 0.0
    %277 = vmatprep.subr.mxu0 0.0
    %278 = vmatpush1.msra.mxu0 0.0
    %279 = vmatprep.subr.mxu0 0.0
    %280 = vmatpush1.msra.mxu0 0.0
    %281 = vmatprep.subr.mxu0 0.0
    %282 = vmatpush1.msra.mxu0 0.0
    %283 = vmatprep.subr.mxu0 0.0
    %284 = vmatpush1.msra.mxu0 0.0
    %285 = vmatprep.subr.mxu0 0.0
    %286 = vmatpush1.msra.mxu0 0.0
    %287 = vmatprep.mubr.f32.mxu0 0.0
    %288 = vmatmul.mubr.f32.gmra.mrb[0].mxu0 %v200
    %v289 = vpop.f32.mrb[0].mxu0
    %v290 = vadd.f32 %v222, %v289
    %v291 = vpop.f32.mrb[0].mxu0
    %292 = vdwg.mxu0
    %293 = vst [vmem:[%s2] sm:$0xff] %v290
    // Predicated region
    $region14: #{_fused_mlp.1} parent=1 // pred_check
      _
    $region15: #{_fused_mlp.1} parent=1 // pred_check_branch
      %295 = sbr.rel (0) target = $region17
    $region16: #{_fused_mlp.1} parent=1 // pred_region
      _
    $region17: #{_fused_mlp.1} parent=1 // pred_fallthru
      _
    // Predicated region
    $region18: #{_fused_mlp.1} parent=1 // pred_check
      _
    $region19: #{_fused_mlp.1} parent=1 // pred_check_branch
      %297 = sbr.rel (0) target = $region21
    $region20: #{_fused_mlp.1} parent=1 // pred_region
      _
    $region21: #{_fused_mlp.1} parent=1 // pred_fallthru
      _
    %298 = vsyncpa [#allocation3], 1

</llo_original>
